<compile_context>
chip_gen: v7x
topology: tpu7x:2x2x1
jax: 0.10.0
libtpu: 0.0.40
codegen_flags: <defaults>
</compile_context>

<pallas_src>
import jax
import jax.numpy as jnp
from jax.experimental import pallas as pl
from jax.experimental.pallas import tpu as pltpu


def _round_up(x, m):
    return (x + m - 1) // m * m


def _num_tensorcores():
    """Best-effort TensorCore count (v7x has 2; v5e/v6e have 1)."""
    try:
        info = pltpu.get_tpu_info()
        for attr in ("num_cores", "num_tensorcores", "cores_per_chip"):
            v = getattr(info, attr, None)
            if isinstance(v, int) and v > 0:
                return v
    except Exception:
        pass
    try:
        v = getattr(jax.local_devices()[0], "num_cores", None)
        if isinstance(v, int) and v > 0:
            return v
    except Exception:
        pass
    return 1


def _pick_tile_rows(rows, n_pad, G, dim_rbf, d, *, num_cores=1,
                    vmem_budget_bytes=24 * 1024 * 1024, max_tile_rows=2048):
    """Pick the per-grid-step row tile from a corrected VMEM model.

    Every streamed/resident row costs a full 128-lane stripe regardless of its
    logical width, resident blocks are counted double-buffered, and the three
    [rows, 2*G*n_pad] f32 in-kernel temporaries (target / iota / two-hot) are
    included so large n_atoms automatically shrinks the tile.
    """
    lane = 128

    def row_bytes(cols, itemsize=4):
        return _round_up(cols, lane) * itemsize

    K = 2 * G * n_pad
    resident = 2 * (
        _round_up(G * dim_rbf, 8) * row_bytes(G * d)    # kron rbf weight
        + _round_up(2 * G, 8) * row_bytes(K)            # segment selector
        + _round_up(K, 8) * row_bytes(G * d)            # kron gather weight
        + 8 * row_bytes(G * d))                         # bias
    streamed_per_row = 2 * (row_bytes(2 * G)            # hot-column ids
                            + row_bytes(G * dim_rbf)    # packed rbf
                            + row_bytes(G * d))         # output
    temp_per_row = 3 * 4 * _round_up(K, lane) + 2 * 4 * _round_up(G * d, lane)
    per_row = streamed_per_row + temp_per_row

    avail = max(vmem_budget_bytes - resident, 1 << 20)
    cap = max(8, min(max_tile_rows, avail // per_row) // 8 * 8)

    r8 = _round_up(rows, 8)
    if r8 <= cap:
        # Split only when a second TensorCore exists (v7x) and each half still
        # has a worthwhile amount of work; on v5e/v6e the grid is serial.
        if num_cores > 1 and rows >= 512:
            tile = _round_up(pl.cdiv(rows, 2), 8)
        else:
            tile = r8
    else:
        tile = cap

    est = resident + tile * per_row + (4 << 20)
    vmem_limit = int(min(max(est, 32 << 20), 48 << 20))
    return tile, vmem_limit


def _a2e_kernel(cols_ref, rbf_ref, wrbf_ref, sel_ref, awt_ref, bias_ref,
                out_ref):
    """One edge tile: R rows x (G edges per row), all 128 lanes dense.

    cols_ref : [R, 2G]  f32   global hot-column ids (j / i per edge group)
    rbf_ref  : [R, G*dim_rbf] f32
    wrbf_ref : [G*dim_rbf, G*d] f32   kron(I_G, W_rbf^T @ W1)
    sel_ref  : [2G, K]  f32   kron(I_2G, ones(1, n_pad)),  K = 2*G*n_pad
    awt_ref  : [K, G*d] f32   kron(I_G, [atom@W2 ; atom@W3])
    bias_ref : [1, G*d] f32   tiled (b_rbf@W1 + b_cat)
    out_ref  : [R, G*d] f32
    """
    R = cols_ref.shape[0]
    K = sel_ref.shape[1]

    # Broadcast each row's 2G hot-column ids across their n_pad-wide segments
    # via a tiny MXU matmul (exactly one nonzero term per output element),
    # then compare against a column iota. Tolerance compare keeps the
    # equality robust to MXU f32 rounding.
    target = jnp.dot(cols_ref[...], sel_ref[...],
                     preferred_element_type=jnp.float32)              # [R, K]
    col_id = jax.lax.broadcasted_iota(jnp.int32, (R, K), 1).astype(jnp.float32)
    twohot = (jnp.abs(col_id - target) < 0.5).astype(jnp.float32)     # [R, K]

    # pre = rbf_blk @ kron(I_G, Wr^T W1) + twohot @ kron(I_G, [aW2; aW3]) + b
    pre = jnp.dot(rbf_ref[...], wrbf_ref[...],
                  preferred_element_type=jnp.float32)
    pre = pre + jnp.dot(twohot, awt_ref[...],
                        preferred_element_type=jnp.float32)
    pre = pre + bias_ref[...]

    # Swish / SiLU
    out_ref[...] = (pre * jax.nn.sigmoid(pre)).astype(out_ref.dtype)


def atom_to_edge_pallas(atom_attr, edge_index, rbf, params, *,
                        vmem_budget_bytes=24 * 1024 * 1024):
    """Pallas implementation of AtomToEdgeLayer.forward.

    atom_attr : [N, dim_edge] f32
    edge_index: [2, E] int  (row 0 = i, row 1 = j)
    rbf       : [E, dim_rbf] f32
    params    : w_rbf [dim_edge, dim_rbf], b_rbf [dim_edge],
                w_cat [dim_edge, 3*dim_edge], b_cat [dim_edge]
                (PyTorch nn.Linear layout: weight is [out, in]).
    Returns {'mji': [E, dim_edge] f32}.
    """
    E, dim_rbf = rbf.shape
    n_atoms, d = atom_attr.shape

    # ---- offline parameter prep (runs once in XLA, fused under jit) ----
    w_cat_t = params["w_cat"].T.astype(jnp.float32)          # [3d, d] = W1|W2|W3
    w1 = w_cat_t[0 * d:1 * d, :]
    w2 = w_cat_t[1 * d:2 * d, :]
    w3 = w_cat_t[2 * d:3 * d, :]
    w_fold = params["w_rbf"].T.astype(jnp.float32) @ w1      # [dim_rbf, d]
    b_fold = (params["b_rbf"].astype(jnp.float32) @ w1
              + params["b_cat"].astype(jnp.float32))          # [d]

    # Atom features pre-multiplied by their concat blocks; j-half then i-half.
    n_pad = _round_up(max(n_atoms, 1), 16)
    atom_pad = jnp.pad(atom_attr.astype(jnp.float32),
                       ((0, n_pad - n_atoms), (0, 0)))
    a_w23 = jnp.concatenate([atom_pad @ w2, atom_pad @ w3], axis=0)  # [2n_pad, d]

    # ---- lane-dense packing: G edges per 128-lane vreg row ----
    G = max(1, min(8, 128 // d)) if d <= 128 else 1
    K = 2 * G * n_pad
    assert K < (1 << 24), "hot-column ids must stay exactly representable in f32"

    eye_g = jnp.eye(G, dtype=jnp.float32)
    wrbf_blk = jnp.kron(eye_g, w_fold)                        # [G*dim_rbf, G*d]
    awt_blk = jnp.kron(eye_g, a_w23)                          # [K, G*d]
    sel = jnp.kron(jnp.eye(2 * G, dtype=jnp.float32),
                   jnp.ones((1, n_pad), jnp.float32))         # [2G, K]
    bias = jnp.tile(b_fold.reshape(1, d), (1, G))             # [1, G*d]

    # ---- edge-axis tiling / padding ----
    rows = pl.cdiv(E, G)
    num_cores = _num_tensorcores()
    tile_rows, vmem_limit = _pick_tile_rows(
        rows, n_pad, G, dim_rbf, d, num_cores=num_cores,
        vmem_budget_bytes=vmem_budget_bytes)
    rows_pad = _round_up(rows, tile_rows)
    e_pad = rows_pad * G

    # Padded edges use atom index 0 and zero rbf; their outputs are sliced off.
    idx = jnp.pad(edge_index.astype(jnp.int32), ((0, 0), (0, e_pad - E)))
    g = jnp.arange(e_pad, dtype=jnp.int32) % G
    col_j = g * (2 * n_pad) + idx[1]                # h_j -> W2 half of segment
    col_i = g * (2 * n_pad) + n_pad + idx[0]        # h_i -> W3 half of segment
    cols = jnp.stack([col_j, col_i], axis=1).reshape(rows_pad, 2 * G)
    cols = cols.astype(jnp.float32)                 # exact: values < 2^24

    rbf_blk = jnp.pad(rbf.astype(jnp.float32), ((0, e_pad - E), (0, 0)))
    rbf_blk = rbf_blk.reshape(rows_pad, G * dim_rbf)          # contiguous, free

    grid = (rows_pad // tile_rows,)
    out = pl.pallas_call(
        _a2e_kernel,
        out_shape=jax.ShapeDtypeStruct((rows_pad, G * d), jnp.float32),
        grid_spec=pltpu.PrefetchScalarGridSpec(
            num_scalar_prefetch=0,
            grid=grid,
            in_specs=[
                pl.BlockSpec((tile_rows, 2 * G), lambda b: (b, 0)),        # hot cols
                pl.BlockSpec((tile_rows, G * dim_rbf), lambda b: (b, 0)),  # packed rbf
                pl.BlockSpec((G * dim_rbf, G * d), lambda b: (0, 0)),      # kron rbf weight
                pl.BlockSpec((2 * G, K), lambda b: (0, 0)),                # segment selector
                pl.BlockSpec((K, G * d), lambda b: (0, 0)),                # kron gather weight
                pl.BlockSpec((1, G * d), lambda b: (0, 0)),                # fused bias
            ],
            out_specs=pl.BlockSpec((tile_rows, G * d), lambda b: (b, 0)),
        ),
        compiler_params=pltpu.CompilerParams(
            dimension_semantics=("parallel",),
            vmem_limit_bytes=vmem_limit),
    )(cols, rbf_blk, wrbf_blk, sel, awt_blk, bias)

    # Free (contiguous) unpack back to one edge per row.
    return {"mji": out.reshape(e_pad, d)[:E]}


def _reference(atom_attr, edge_index, rbf, params):
    h_i = atom_attr[edge_index[0, :], :]
    h_j = atom_attr[edge_index[1, :], :]
    lin_rbf = rbf @ params["w_rbf"].T + params["b_rbf"]
    concat = jnp.concatenate([lin_rbf, h_j, h_i], axis=-1)
    pre = concat @ params["w_cat"].T + params["b_cat"]
    return pre * jax.nn.sigmoid(pre)


if __name__ == "__main__":
    key = jax.random.PRNGKey(0)
    k1, k2, k3, k4, k5, k6, k7 = jax.random.split(key, 7)

    n_atoms = 10
    n_edges = 602          # not a multiple of 4 or 8 -> exercises padding paths
    dim_rbf = 16
    dim_edge = 32

    # deterministic synthetic inputs
    atom_attr = jax.random.normal(k1, (n_atoms, dim_edge), dtype=jnp.float32)
    edge_index = jax.random.randint(k2, (2, n_edges), 0, n_atoms, dtype=jnp.int32)
    rbf = jax.random.normal(k3, (n_edges, dim_rbf), dtype=jnp.float32)

    # deterministic synthetic parameters (PyTorch Linear shapes: [out, in])
    params = {
        "w_rbf": jax.random.normal(k4, (dim_edge, dim_rbf), jnp.float32)
                 * (1.0 / jnp.sqrt(1.0 * dim_rbf)),
        "b_rbf": jax.random.normal(k5, (dim_edge,), jnp.float32) * 0.1,
        "w_cat": jax.random.normal(k6, (dim_edge, 3 * dim_edge), jnp.float32)
                 * (1.0 / jnp.sqrt(3.0 * dim_edge)),
        "b_cat": jax.random.normal(k7, (dim_edge,), jnp.float32) * 0.1,
    }

    run = jax.jit(atom_to_edge_pallas)
    out = run(atom_attr, edge_index, rbf, params)
    m_ji = jax.block_until_ready(out["mji"])

    ref = _reference(atom_attr, edge_index, rbf, params)
    assert m_ji.shape == (n_edges, dim_edge)
    err = float(jnp.max(jnp.abs(m_ji - ref)))
    assert err < 1e-3, f"max abs error {err}"

    print("KERNEL_OK")
</pallas_src>

<mosaic_0001>
module attributes {stable_mosaic.version = 11 : i64} {
  func.func @_a2e_kernel(%arg0: i32, %arg1: memref<152x8xf32, #tpu.memory_space<vmem>>, %arg2: memref<152x64xf32, #tpu.memory_space<vmem>>, %arg3: memref<64x128xf32, #tpu.memory_space<vmem>>, %arg4: memref<8x128xf32, #tpu.memory_space<vmem>>, %arg5: memref<128x128xf32, #tpu.memory_space<vmem>>, %arg6: memref<1x128xf32, #tpu.memory_space<vmem>>, %arg7: memref<152x128xf32, #tpu.memory_space<vmem>>) attributes {dimension_semantics = [#tpu.dimension_semantics<parallel>], iteration_bounds = array<i64: 1>, scalar_prefetch = 0 : i64, scratch_operands = 0 : i64, tpu.core_type = #tpu.core_type<tc>, window_params = [{transform_indices = @transform_0, window_bounds = array<i64: 152, 8>}, {transform_indices = @transform_1, window_bounds = array<i64: 152, 64>}, {pipeline_mode = #tpu.pipeline_mode<synchronous>, transform_indices = @transform_2, window_bounds = array<i64: 64, 128>}, {pipeline_mode = #tpu.pipeline_mode<synchronous>, transform_indices = @transform_3, window_bounds = array<i64: 8, 128>}, {pipeline_mode = #tpu.pipeline_mode<synchronous>, transform_indices = @transform_4, window_bounds = array<i64: 128, 128>}, {pipeline_mode = #tpu.pipeline_mode<synchronous>, transform_indices = @transform_5, window_bounds = array<i64: 1, 128>}, {transform_indices = @transform_6, window_bounds = array<i64: 152, 128>}]} {
    %c0 = arith.constant 0 : index
    %c0_0 = arith.constant 0 : index
    %0 = vector.load %arg1[%c0, %c0_0] : memref<152x8xf32, #tpu.memory_space<vmem>>, vector<152x8xf32>
    %c0_1 = arith.constant 0 : index
    %c0_2 = arith.constant 0 : index
    %1 = vector.load %arg4[%c0_1, %c0_2] : memref<8x128xf32, #tpu.memory_space<vmem>>, vector<8x128xf32>
    %cst = arith.constant dense<0.000000e+00> : vector<152x128xf32>
    %2 = tpu.matmul %0, %1, %cst {dimension_numbers = #tpu.dot_dimension_numbers<[1], [0], [0], [1], [0, 0, 1, 1], [], []>} : vector<152x8xf32>, vector<8x128xf32>, vector<152x128xf32> -> vector<152x128xf32>
    %3 = tpu.iota {dimensions = array<i32: 1>} : vector<152x128xi32>
    %4 = arith.sitofp %3 : vector<152x128xi32> to vector<152x128xf32>
    %5 = arith.subf %4, %2 : vector<152x128xf32>
    %6 = math.absf %5 : vector<152x128xf32>
    %cst_3 = arith.constant 5.000000e-01 : f32
    %7 = vector.broadcast %cst_3 : f32 to vector<152x128xf32>
    %8 = arith.cmpf olt, %6, %7 : vector<152x128xf32>
    %9 = arith.extui %8 : vector<152x128xi1> to vector<152x128xi32>
    %10 = arith.sitofp %9 : vector<152x128xi32> to vector<152x128xf32>
    %c0_4 = arith.constant 0 : index
    %c0_5 = arith.constant 0 : index
    %11 = vector.load %arg2[%c0_4, %c0_5] : memref<152x64xf32, #tpu.memory_space<vmem>>, vector<152x64xf32>
    %c0_6 = arith.constant 0 : index
    %c0_7 = arith.constant 0 : index
    %12 = vector.load %arg3[%c0_6, %c0_7] : memref<64x128xf32, #tpu.memory_space<vmem>>, vector<64x128xf32>
    %cst_8 = arith.constant dense<0.000000e+00> : vector<152x128xf32>
    %13 = tpu.matmul %11, %12, %cst_8 {dimension_numbers = #tpu.dot_dimension_numbers<[1], [0], [0], [1], [0, 0, 1, 1], [], []>} : vector<152x64xf32>, vector<64x128xf32>, vector<152x128xf32> -> vector<152x128xf32>
    %c0_9 = arith.constant 0 : index
    %c0_10 = arith.constant 0 : index
    %14 = vector.load %arg5[%c0_9, %c0_10] : memref<128x128xf32, #tpu.memory_space<vmem>>, vector<128x128xf32>
    %cst_11 = arith.constant dense<0.000000e+00> : vector<152x128xf32>
    %15 = tpu.matmul %10, %14, %cst_11 {dimension_numbers = #tpu.dot_dimension_numbers<[1], [0], [0], [1], [0, 0, 1, 1], [], []>} : vector<152x128xf32>, vector<128x128xf32>, vector<152x128xf32> -> vector<152x128xf32>
    %16 = arith.addf %13, %15 : vector<152x128xf32>
    %c0_12 = arith.constant 0 : index
    %c0_13 = arith.constant 0 : index
    %17 = vector.load %arg6[%c0_12, %c0_13] : memref<1x128xf32, #tpu.memory_space<vmem>>, vector<1x128xf32>
    %18 = vector.broadcast %17 : vector<1x128xf32> to vector<152x128xf32>
    %19 = arith.addf %16, %18 : vector<152x128xf32>
    %20 = arith.negf %19 : vector<152x128xf32>
    %21 = math.exp %20 : vector<152x128xf32>
    %cst_14 = arith.constant 1.000000e+00 : f32
    %22 = vector.broadcast %cst_14 : f32 to vector<152x128xf32>
    %23 = arith.addf %22, %21 : vector<152x128xf32>
    %24 = arith.divf %22, %23 : vector<152x128xf32>
    %25 = arith.mulf %19, %24 : vector<152x128xf32>
    %c0_15 = arith.constant 0 : index
    %c0_16 = arith.constant 0 : index
    %26 = vector.load %arg7[%c0_15, %c0_16] : memref<152x128xf32, #tpu.memory_space<vmem>>, vector<152x128xf32>
    tpu.vector_store %arg7[%c0_15, %c0_16], %25 {strides = array<i32>} : memref<152x128xf32, #tpu.memory_space<vmem>>, vector<152x128xf32>,
    return
  }
  func.func @transform_0(%arg0: i32) -> (i32, i32) {
    %c0_i32 = arith.constant 0 : i32
    %c0_i32_0 = arith.constant 0 : i32
    return %arg0, %c0_i32 : i32, i32
  }
  func.func @transform_1(%arg0: i32) -> (i32, i32) {
    %c0_i32 = arith.constant 0 : i32
    %c0_i32_0 = arith.constant 0 : i32
    return %arg0, %c0_i32 : i32, i32
  }
  func.func @transform_2(%arg0: i32) -> (i32, i32) {
    %c0_i32 = arith.constant 0 : i32
    %c0_i32_0 = arith.constant 0 : i32
    %c0_i32_1 = arith.constant 0 : i32
    return %c0_i32, %c0_i32_0 : i32, i32
  }
  func.func @transform_3(%arg0: i32) -> (i32, i32) {
    %c0_i32 = arith.constant 0 : i32
    %c0_i32_0 = arith.constant 0 : i32
    %c0_i32_1 = arith.constant 0 : i32
    return %c0_i32, %c0_i32_0 : i32, i32
  }
  func.func @transform_4(%arg0: i32) -> (i32, i32) {
    %c0_i32 = arith.constant 0 : i32
    %c0_i32_0 = arith.constant 0 : i32
    %c0_i32_1 = arith.constant 0 : i32
    return %c0_i32, %c0_i32_0 : i32, i32
  }
  func.func @transform_5(%arg0: i32) -> (i32, i32) {
    %c0_i32 = arith.constant 0 : i32
    %c0_i32_0 = arith.constant 0 : i32
    %c0_i32_1 = arith.constant 0 : i32
    return %c0_i32, %c0_i32_0 : i32, i32
  }
  func.func @transform_6(%arg0: i32) -> (i32, i32) {
    %c0_i32 = arith.constant 0 : i32
    %c0_i32_0 = arith.constant 0 : i32
    return %arg0, %c0_i32 : i32, i32
  }
}

</mosaic_0001>

<llo_original>
// kernel: atom_to_edge_pallas.1
$region0: #{atom_to_edge_pallas.1}
  #allocation0 [shape = 'u32[]', space=smem, size = 0x4, offset = 0x4, fixed_abs, tag = 'smem constant byte address 0x4 - core index']
  #allocation1 [shape = 'u32[144,128]{1,0:T(1,128)}', space=vmem, size = 0x12000, scoped, tag = 'internal scratch']
  %s0 = inlined_call_operand.vmem [shape: f32[152,8], index: 0, kind: input, shape index: {}]
  %s1 = inlined_call_operand.vmem [shape: f32[152,64], index: 1, kind: input, shape index: {}]
  %s2 = inlined_call_operand.vmem [shape: f32[64,128], index: 2, kind: input, shape index: {}]
  %s3 = inlined_call_operand.vmem [shape: f32[8,128], index: 3, kind: input, shape index: {}]
  %s4 = inlined_call_operand.vmem [shape: f32[128,128], index: 4, kind: input, shape index: {}]
  %s5 = inlined_call_operand.vmem [shape: f32[1,128], index: 5, kind: input, shape index: {}]
  %s6 = inlined_call_operand.vmem [shape: f32[152,128], index: 6, kind: output, shape index: {}]
  %s7 = sld [smem:[#allocation0]]
  $region34: #{atom_to_edge_pallas.1} parent=0
    _
  %s9 = ssub.s32 1, %s7
  %s10 = scalar_select 0, %s9, %s7
  // Predicated region
  $region2: #{atom_to_edge_pallas.1} parent=0 // pred_check
    _
  $region3: #{atom_to_edge_pallas.1} parent=0 // pred_check_branch
    %12 = sbr.rel (0) target = $region5
  $region4: #{atom_to_edge_pallas.1} parent=0 // pred_region
    _
  $region5: #{atom_to_edge_pallas.1} parent=0 // pred_fallthru
    _
  // Predicated region
  $region6: #{atom_to_edge_pallas.1} parent=0 // pred_check
    _
  $region7: #{atom_to_edge_pallas.1} parent=0 // pred_check_branch
    %14 = sbr.rel (0) target = $region9
  $region8: #{atom_to_edge_pallas.1} parent=0 // pred_region
    _
  $region9: #{atom_to_edge_pallas.1} parent=0 // pred_fallthru
    _
  // Predicated region
  $region10: #{atom_to_edge_pallas.1} parent=0 // pred_check
    _
  $region11: #{atom_to_edge_pallas.1} parent=0 // pred_check_branch
    %16 = sbr.rel (0) target = $region13
  $region12: #{atom_to_edge_pallas.1} parent=0 // pred_region
    _
  $region13: #{atom_to_edge_pallas.1} parent=0 // pred_fallthru
    _
  // Predicated region
  $region14: #{atom_to_edge_pallas.1} parent=0 // pred_check
    _
  $region15: #{atom_to_edge_pallas.1} parent=0 // pred_check_branch
    %18 = sbr.rel (0) target = $region17
  $region16: #{atom_to_edge_pallas.1} parent=0 // pred_region
    _
  $region17: #{atom_to_edge_pallas.1} parent=0 // pred_fallthru
    _
  // Predicated region
  $region18: #{atom_to_edge_pallas.1} parent=0 // pred_check
    _
  $region19: #{atom_to_edge_pallas.1} parent=0 // pred_check_branch
    %20 = sbr.rel (0) target = $region21
  $region20: #{atom_to_edge_pallas.1} parent=0 // pred_region
    _
  $region21: #{atom_to_edge_pallas.1} parent=0 // pred_fallthru
    _
  // Predicated region
  $region22: #{atom_to_edge_pallas.1} parent=0 // pred_check
    _
  $region23: #{atom_to_edge_pallas.1} parent=0 // pred_check_branch
    %22 = sbr.rel (0) target = $region25
  $region24: #{atom_to_edge_pallas.1} parent=0 // pred_region
    _
  $region25: #{atom_to_edge_pallas.1} parent=0 // pred_fallthru
    _
  %v23 = vld [vmem:[%s0] sm:$0xff]
  %v24 = vld [vmem:[%s0 + $0x8] sm:$0xff]
  %v25 = vld [vmem:[%s0 + $0x10] sm:$0xff]
  %v26 = vld [vmem:[%s0 + $0x18] sm:$0xff]
  %v27 = vld [vmem:[%s0 + $0x20] sm:$0xff]
  %v28 = vld [vmem:[%s0 + $0x28] sm:$0xff]
  %v29 = vld [vmem:[%s0 + $0x30] sm:$0xff]
  %v30 = vld [vmem:[%s0 + $0x38] sm:$0xff]
  %v31 = vld [vmem:[%s0 + $0x40] sm:$0xff]
  %v32 = vld [vmem:[%s0 + $0x48] sm:$0xff]
  %v33 = vld [vmem:[%s0 + $0x50] sm:$0xff]
  %v34 = vld [vmem:[%s0 + $0x58] sm:$0xff]
  %v35 = vld [vmem:[%s0 + $0x60] sm:$0xff]
  %v36 = vld [vmem:[%s0 + $0x68] sm:$0xff]
  %v37 = vld [vmem:[%s0 + $0x70] sm:$0xff]
  %v38 = vld [vmem:[%s0 + $0x78] sm:$0xff]
  %v39 = vld [vmem:[%s0 + $0x80] sm:$0xff]
  %v40 = vld [vmem:[%s0 + $0x88] sm:$0xff]
  %v41 = vld [vmem:[%s0 + $0x90] sm:$0xff]
  %v42 = vld [vmem:[%s3] sm:$0xff]
  %vm43 = vcmask 64512
  %v45 = vsel %vm43, %v23, 0
  %v48 = vsel %vm43, %v24, 0
  %v51 = vsel %vm43, %v25, 0
  %v54 = vsel %vm43, %v26, 0
  %v57 = vsel %vm43, %v27, 0
  %v60 = vsel %vm43, %v28, 0
  %v63 = vsel %vm43, %v29, 0
  %v66 = vsel %vm43, %v30, 0
  %v69 = vsel %vm43, %v31, 0
  %v72 = vsel %vm43, %v32, 0
  %v75 = vsel %vm43, %v33, 0
  %v78 = vsel %vm43, %v34, 0
  %v81 = vsel %vm43, %v35, 0
  %v84 = vsel %vm43, %v36, 0
  %v87 = vsel %vm43, %v37, 0
  %v90 = vsel %vm43, %v38, 0
  %v93 = vsel %vm43, %v39, 0
  %v96 = vsel %vm43, %v40, 0
  %v99 = vsel %vm43, %v41, 0
  %101 = vmatprep.subr.mxu0 0.0
  %102 = vmatpush1.msra.mxu0 %v42
  %103 = vmatprep.subr.mxu0 0.0
  %104 = vmatpush1.msra.mxu0 0.0
  %105 = vmatprep.subr.mxu0 0.0
  %106 = vmatpush1.msra.mxu0 0.0
  %107 = vmatprep.subr.mxu0 0.0
  %108 = vmatpush1.msra.mxu0 0.0
  %109 = vmatprep.subr.mxu0 0.0
  %110 = vmatpush1.msra.mxu0 0.0
  %111 = vmatprep.subr.mxu0 0.0
  %112 = vmatpush1.msra.mxu0 0.0
  %113 = vmatprep.subr.mxu0 0.0
  %114 = vmatpush1.msra.mxu0 0.0
  %115 = vmatprep.subr.mxu0 0.0
  %116 = vmatpush1.msra.mxu0 0.0
  %117 = vmatprep.subr.mxu0 0.0
  %118 = vmatpush1.msra.mxu0 0.0
  %119 = vmatprep.subr.mxu0 0.0
  %120 = vmatpush1.msra.mxu0 0.0
  %121 = vmatprep.subr.mxu0 0.0
  %122 = vmatpush1.msra.mxu0 0.0
  %123 = vmatprep.subr.mxu0 0.0
  %124 = vmatpush1.msra.mxu0 0.0
  %125 = vmatprep.subr.mxu0 0.0
  %126 = vmatpush1.msra.mxu0 0.0
  %127 = vmatprep.subr.mxu0 0.0
  %128 = vmatpush1.msra.mxu0 0.0
  %129 = vmatprep.subr.mxu0 0.0
  %130 = vmatpush1.msra.mxu0 0.0
  %131 = vmatprep.subr.mxu0 0.0
  %132 = vmatpush1.msra.mxu0 0.0
  %133 = vmatprep.subr.mxu0 0.0
  %134 = vmatpush1.msra.mxu0 0.0
  %135 = vmatprep.subr.mxu0 0.0
  %136 = vmatpush1.msra.mxu0 0.0
  %137 = vmatprep.subr.mxu0 0.0
  %138 = vmatpush1.msra.mxu0 0.0
  %139 = vmatprep.subr.mxu0 0.0
  %140 = vmatpush1.msra.mxu0 0.0
  %141 = vmatprep.subr.mxu0 0.0
  %142 = vmatpush1.msra.mxu0 0.0
  %143 = vmatprep.subr.mxu0 0.0
  %144 = vmatpush1.msra.mxu0 0.0
  %145 = vmatprep.subr.mxu0 0.0
  %146 = vmatpush1.msra.mxu0 0.0
  %147 = vmatprep.subr.mxu0 0.0
  %148 = vmatpush1.msra.mxu0 0.0
  %149 = vmatprep.subr.mxu0 0.0
  %150 = vmatpush1.msra.mxu0 0.0
  %151 = vmatprep.subr.mxu0 0.0
  %152 = vmatpush1.msra.mxu0 0.0
  %153 = vmatprep.subr.mxu0 0.0
  %154 = vmatpush1.msra.mxu0 0.0
  %155 = vmatprep.subr.mxu0 0.0
  %156 = vmatpush1.msra.mxu0 0.0
  %157 = vmatprep.subr.mxu0 0.0
  %158 = vmatpush1.msra.mxu0 0.0
  %159 = vmatprep.subr.mxu0 0.0
  %160 = vmatpush1.msra.mxu0 0.0
  %161 = vmatprep.subr.mxu0 0.0
  %162 = vmatpush1.msra.mxu0 0.0
  %163 = vmatprep.subr.mxu0 0.0
  %164 = vmatpush1.msra.mxu0 0.0
  %165 = vmatprep.mubr.f32.mxu0 0.0
  %166 = vmatmul.mubr.f32.gmra.mrb[0].mxu0 %v45
  %v167 = vpop.f32.mrb[0].mxu0
  %v168 = vadd.f32 0.0, %v167
  %v169 = vpop.f32.mrb[0].mxu0
  %170 = vmatprep.mubr.f32.mxu0 0.0
  %171 = vmatmul.mubr.f32.gmra.mrb[0].mxu0 %v48
  %v172 = vpop.f32.mrb[0].mxu0
  %v173 = vadd.f32 0.0, %v172
  %v174 = vpop.f32.mrb[0].mxu0
  %175 = vmatprep.mubr.f32.mxu0 0.0
  %176 = vmatmul.mubr.f32.gmra.mrb[0].mxu0 %v51
  %v177 = vpop.f32.mrb[0].mxu0
  %v178 = vadd.f32 0.0, %v177
  %v179 = vpop.f32.mrb[0].mxu0
  %180 = vmatprep.mubr.f32.mxu0 0.0
  %181 = vmatmul.mubr.f32.gmra.mrb[0].mxu0 %v54
  %v182 = vpop.f32.mrb[0].mxu0
  %v183 = vadd.f32 0.0, %v182
  %v184 = vpop.f32.mrb[0].mxu0
  %185 = vmatprep.mubr.f32.mxu0 0.0
  %186 = vmatmul.mubr.f32.gmra.mrb[0].mxu0 %v57
  %v187 = vpop.f32.mrb[0].mxu0
  %v188 = vadd.f32 0.0, %v187
  %v189 = vpop.f32.mrb[0].mxu0
  %190 = vmatprep.mubr.f32.mxu0 0.0
  %191 = vmatmul.mubr.f32.gmra.mrb[0].mxu0 %v60
  %v192 = vpop.f32.mrb[0].mxu0
  %v193 = vadd.f32 0.0, %v192
  %v194 = vpop.f32.mrb[0].mxu0
  %195 = vmatprep.mubr.f32.mxu0 0.0
  %196 = vmatmul.mubr.f32.gmra.mrb[0].mxu0 %v63
  %v197 = vpop.f32.mrb[0].mxu0
  %v198 = vadd.f32 0.0, %v197
  %v199 = vpop.f32.mrb[0].mxu0
  %200 = vmatprep.mubr.f32.mxu0 0.0
  %201 = vmatmul.mubr.f32.gmra.mrb[0].mxu0 %v66
  %v202 = vpop.f32.mrb[0].mxu0
  %v203 = vadd.f32 0.0, %v202
  %v204 = vpop.f32.mrb[0].mxu0
  %205 = vmatprep.mubr.f32.mxu0 0.0
  %206 = vmatmul.mubr.f32.gmra.mrb[0].mxu0 %v69
  %v207 = vpop.f32.mrb[0].mxu0
  %v208 = vadd.f32 0.0, %v207
  %v209 = vpop.f32.mrb[0].mxu0
  %210 = vmatprep.mubr.f32.mxu0 0.0
  %211 = vmatmul.mubr.f32.gmra.mrb[0].mxu0 %v72
  %v212 = vpop.f32.mrb[0].mxu0
  %v213 = vadd.f32 0.0, %v212
  %v214 = vpop.f32.mrb[0].mxu0
  %215 = vmatprep.mubr.f32.mxu0 0.0
  %216 = vmatmul.mubr.f32.gmra.mrb[0].mxu0 %v75
  %v217 = vpop.f32.mrb[0].mxu0
  %v218 = vadd.f32 0.0, %v217
  %v219 = vpop.f32.mrb[0].mxu0
  %220 = vmatprep.mubr.f32.mxu0 0.0
  %221 = vmatmul.mubr.f32.gmra.mrb[0].mxu0 %v78
  %v222 = vpop.f32.mrb[0].mxu0
  %v223 = vadd.f32 0.0, %v222
  %v224 = vpop.f32.mrb[0].mxu0
  %225 = vmatprep.mubr.f32.mxu0 0.0
  %226 = vmatmul.mubr.f32.gmra.mrb[0].mxu0 %v81
  %v227 = vpop.f32.mrb[0].mxu0
  %v228 = vadd.f32 0.0, %v227
  %v229 = vpop.f32.mrb[0].mxu0
  %230 = vmatprep.mubr.f32.mxu0 0.0
  %231 = vmatmul.mubr.f32.gmra.mrb[0].mxu0 %v84
  %v232 = vpop.f32.mrb[0].mxu0
  %v233 = vadd.f32 0.0, %v232
  %v234 = vpop.f32.mrb[0].mxu0
  %235 = vmatprep.mubr.f32.mxu0 0.0
  %236 = vmatmul.mubr.f32.gmra.mrb[0].mxu0 %v87
  %v237 = vpop.f32.mrb[0].mxu0
  %v238 = vadd.f32 0.0, %v237
  %v239 = vpop.f32.mrb[0].mxu0
  %240 = vmatprep.mubr.f32.mxu0 0.0
  %241 = vmatmul.mubr.f32.gmra.mrb[0].mxu0 %v90
  %v242 = vpop.f32.mrb[0].mxu0
  %v243 = vadd.f32 0.0, %v242
  %v244 = vpop.f32.mrb[0].mxu0
  %245 = vmatprep.mubr.f32.mxu0 0.0
  %246 = vmatmul.mubr.f32.gmra.mrb[0].mxu0 %v93
  %v247 = vpop.f32.mrb[0].mxu0
  %v248 = vadd.f32 0.0, %v247
  %v249 = vpop.f32.mrb[0].mxu0
  %250 = vmatprep.mubr.f32.mxu0 0.0
  %251 = vmatmul.mubr.f32.gmra.mrb[0].mxu0 %v96
  %v252 = vpop.f32.mrb[0].mxu0
  %v253 = vadd.f32 0.0, %v252
  %v254 = vpop.f32.mrb[0].mxu0
  %255 = vmatprep.mubr.f32.mxu0 0.0
  %256 = vmatmul.mubr.f32.gmra.mrb[0].mxu0 %v99
  %v257 = vpop.f32.mrb[0].mxu0
  %v258 = vadd.f32 0.0, %v257
  %v259 = vpop.f32.mrb[0].mxu0
  %260 = vdwg.mxu0
  %v261 = vlaneseq
  %v262 = vand.u32 %v261, 127
  %v263 = vcvt.s32.f32 %v262
  %v264 = vsub.f32 %v263, %v168
  %v265 = vsub.f32 %v263, %v173
  %v266 = vsub.f32 %v263, %v178
  %v267 = vsub.f32 %v263, %v183
  %v268 = vsub.f32 %v263, %v188
  %v269 = vsub.f32 %v263, %v193
  %v270 = vsub.f32 %v263, %v198
  %v271 = vsub.f32 %v263, %v203
  %v272 = vsub.f32 %v263, %v208
  %v273 = vsub.f32 %v263, %v213
  %v274 = vsub.f32 %v263, %v218
  %v275 = vsub.f32 %v263, %v223
  %v276 = vsub.f32 %v263, %v228
  %v277 = vsub.f32 %v263, %v233
  %v278 = vsub.f32 %v263, %v238
  %v279 = vsub.f32 %v263, %v243
  %v280 = vsub.f32 %v263, %v248
  %v281 = vsub.f32 %v263, %v253
  %v282 = vsub.f32 %v263, %v258
  %v283 = vand.u32 2147483647, %v264
  %v284 = vand.u32 2147483647, %v265
  %v285 = vand.u32 2147483647, %v266
  %v286 = vand.u32 2147483647, %v267
  %v287 = vand.u32 2147483647, %v268
  %v288 = vand.u32 2147483647, %v269
  %v289 = vand.u32 2147483647, %v270
  %v290 = vand.u32 2147483647, %v271
  %v291 = vand.u32 2147483647, %v272
  %v292 = vand.u32 2147483647, %v273
  %v293 = vand.u32 2147483647, %v274
  %v294 = vand.u32 2147483647, %v275
  %v295 = vand.u32 2147483647, %v276
  %v296 = vand.u32 2147483647, %v277
  %v297 = vand.u32 2147483647, %v278
  %v298 = vand.u32 2147483647, %v279
  %v299 = vand.u32 2147483647, %v280
  %v300 = vand.u32 2147483647, %v281
  %v301 = vand.u32 2147483647, %v282
  %vm302 = vcmp.lt.f32.partialorder %v283, 0.5
  %vm303 = vcmp.lt.f32.partialorder %v284, 0.5
  %vm304 = vcmp.lt.f32.partialorder %v285, 0.5
  %vm305 = vcmp.lt.f32.partialorder %v286, 0.5
  %vm306 = vcmp.lt.f32.partialorder %v287, 0.5
  %vm307 = vcmp.lt.f32.partialorder %v288, 0.5
  %vm308 = vcmp.lt.f32.partialorder %v289, 0.5
  %vm309 = vcmp.lt.f32.partialorder %v290, 0.5
  %vm310 = vcmp.lt.f32.partialorder %v291, 0.5
  %vm311 = vcmp.lt.f32.partialorder %v292, 0.5
  %vm312 = vcmp.lt.f32.partialorder %v293, 0.5
  %vm313 = vcmp.lt.f32.partialorder %v294, 0.5
  %vm314 = vcmp.lt.f32.partialorder %v295, 0.5
  %vm315 = vcmp.lt.f32.partialorder %v296, 0.5
  %vm316 = vcmp.lt.f32.partialorder %v297, 0.5
  %vm317 = vcmp.lt.f32.partialorder %v298, 0.5
  %vm318 = vcmp.lt.f32.partialorder %v299, 0.5
  %vm319 = vcmp.lt.f32.partialorder %v300, 0.5
  %vm320 = vcmp.lt.f32.partialorder %v301, 0.5
  %v321 = vsel %vm302, 1, 0
  %v322 = vsel %vm303, 1, 0
  %v323 = vsel %vm304, 1, 0
  %v324 = vsel %vm305, 1, 0
  %v325 = vsel %vm306, 1, 0
  %v326 = vsel %vm307, 1, 0
  %v327 = vsel %vm308, 1, 0
  %v328 = vsel %vm309, 1, 0
  %v329 = vsel %vm310, 1, 0
  %v330 = vsel %vm311, 1, 0
  %v331 = vsel %vm312, 1, 0
  %v332 = vsel %vm313, 1, 0
  %v333 = vsel %vm314, 1, 0
  %v334 = vsel %vm315, 1, 0
  %v335 = vsel %vm316, 1, 0
  %v336 = vsel %vm317, 1, 0
  %v337 = vsel %vm318, 1, 0
  %v338 = vsel %vm319, 1, 0
  %v339 = vsel %vm320, 1, 0
  %v340 = vcvt.s32.f32 %v321
  %v341 = vcvt.s32.f32 %v322
  %v342 = vcvt.s32.f32 %v323
  %v343 = vcvt.s32.f32 %v324
  %v344 = vcvt.s32.f32 %v325
  %v345 = vcvt.s32.f32 %v326
  %v346 = vcvt.s32.f32 %v327
  %v347 = vcvt.s32.f32 %v328
  %v348 = vcvt.s32.f32 %v329
  %v349 = vcvt.s32.f32 %v330
  %v350 = vcvt.s32.f32 %v331
  %v351 = vcvt.s32.f32 %v332
  %v352 = vcvt.s32.f32 %v333
  %v353 = vcvt.s32.f32 %v334
  %v354 = vcvt.s32.f32 %v335
  %v355 = vcvt.s32.f32 %v336
  %v356 = vcvt.s32.f32 %v337
  %v357 = vcvt.s32.f32 %v338
  %v358 = vcvt.s32.f32 %v339
  %v359 = vld [vmem:[%s1] sm:$0xff]
  %v360 = vld [vmem:[%s1 + $0x8] sm:$0xff]
  %v361 = vld [vmem:[%s1 + $0x10] sm:$0xff]
  %v362 = vld [vmem:[%s1 + $0x18] sm:$0xff]
  %v363 = vld [vmem:[%s1 + $0x20] sm:$0xff]
  %v364 = vld [vmem:[%s1 + $0x28] sm:$0xff]
  %v365 = vld [vmem:[%s1 + $0x30] sm:$0xff]
  %v366 = vld [vmem:[%s1 + $0x38] sm:$0xff]
  %v367 = vld [vmem:[%s1 + $0x40] sm:$0xff]
  %v368 = vld [vmem:[%s1 + $0x48] sm:$0xff]
  %v369 = vld [vmem:[%s1 + $0x50] sm:$0xff]
  %v370 = vld [vmem:[%s1 + $0x58] sm:$0xff]
  %v371 = vld [vmem:[%s1 + $0x60] sm:$0xff]
  %v372 = vld [vmem:[%s1 + $0x68] sm:$0xff]
  %v373 = vld [vmem:[%s1 + $0x70] sm:$0xff]
  %v374 = vld [vmem:[%s1 + $0x78] sm:$0xff]
  %v375 = vld [vmem:[%s1 + $0x80] sm:$0xff]
  %v376 = vld [vmem:[%s1 + $0x88] sm:$0xff]
  %v377 = vld [vmem:[%s1 + $0x90] sm:$0xff]
  %v378 = vld [vmem:[%s2] sm:$0xff]
  %v379 = vld [vmem:[%s2 + $0x8] sm:$0xff]
  %v380 = vld [vmem:[%s2 + $0x10] sm:$0xff]
  %v381 = vld [vmem:[%s2 + $0x18] sm:$0xff]
  %v382 = vld [vmem:[%s2 + $0x20] sm:$0xff]
  %v383 = vld [vmem:[%s2 + $0x28] sm:$0xff]
  %v384 = vld [vmem:[%s2 + $0x30] sm:$0xff]
  %v385 = vld [vmem:[%s2 + $0x38] sm:$0xff]
  %v386 = vld [vmem:[%s4] sm:$0xff]
  %v387 = vld [vmem:[%s4 + $0x8] sm:$0xff]
  %v388 = vld [vmem:[%s4 + $0x10] sm:$0xff]
  %v389 = vld [vmem:[%s4 + $0x18] sm:$0xff]
  %v390 = vld [vmem:[%s4 + $0x20] sm:$0xff]
  %v391 = vld [vmem:[%s4 + $0x28] sm:$0xff]
  %v392 = vld [vmem:[%s4 + $0x30] sm:$0xff]
  %v393 = vld [vmem:[%s4 + $0x38] sm:$0xff]
  %v394 = vld [vmem:[%s4 + $0x40] sm:$0xff]
  %v395 = vld [vmem:[%s4 + $0x48] sm:$0xff]
  %v396 = vld [vmem:[%s4 + $0x50] sm:$0xff]
  %v397 = vld [vmem:[%s4 + $0x58] sm:$0xff]
  %v398 = vld [vmem:[%s4 + $0x60] sm:$0xff]
  %v399 = vld [vmem:[%s4 + $0x68] sm:$0xff]
  %v400 = vld [vmem:[%s4 + $0x70] sm:$0xff]
  %v401 = vld [vmem:[%s4 + $0x78] sm:$0xff]
  %402 = vmatprep.subr.mxu0 0.0
  %403 = vmatpush1.msra.mxu0 %v386
  %404 = vmatprep.subr.mxu0 0.0
  %405 = vmatpush1.msra.mxu0 %v387
  %406 = vmatprep.subr.mxu0 0.0
  %407 = vmatpush1.msra.mxu0 %v388
  %408 = vmatprep.subr.mxu0 0.0
  %409 = vmatpush1.msra.mxu0 %v389
  %410 = vmatprep.subr.mxu0 0.0
  %411 = vmatpush1.msra.mxu0 %v390
  %412 = vmatprep.subr.mxu0 0.0
  %413 = vmatpush1.msra.mxu0 %v391
  %414 = vmatprep.subr.mxu0 0.0
  %415 = vmatpush1.msra.mxu0 %v392
  %416 = vmatprep.subr.mxu0 0.0
  %417 = vmatpush1.msra.mxu0 %v393
  %418 = vmatprep.subr.mxu0 0.0
  %419 = vmatpush1.msra.mxu0 %v394
  %420 = vmatprep.subr.mxu0 0.0
  %421 = vmatpush1.msra.mxu0 %v395
  %422 = vmatprep.subr.mxu0 0.0
  %423 = vmatpush1.msra.mxu0 %v396
  %424 = vmatprep.subr.mxu0 0.0
  %425 = vmatpush1.msra.mxu0 %v397
  %426 = vmatprep.subr.mxu0 0.0
  %427 = vmatpush1.msra.mxu0 %v398
  %428 = vmatprep.subr.mxu0 0.0
  %429 = vmatpush1.msra.mxu0 %v399
  %430 = vmatprep.subr.mxu0 0.0
  %431 = vmatpush1.msra.mxu0 %v400
  %432 = vmatprep.subr.mxu0 0.0
  %433 = vmatpush1.msra.mxu0 %v401
  %434 = vmatprep.subr.mxu0 0.0
  %435 = vmatpush1.msra.mxu0 0.0
  %436 = vmatprep.subr.mxu0 0.0
  %437 = vmatpush1.msra.mxu0 0.0
  %438 = vmatprep.subr.mxu0 0.0
  %439 = vmatpush1.msra.mxu0 0.0
  %440 = vmatprep.subr.mxu0 0.0
  %441 = vmatpush1.msra.mxu0 0.0
  %442 = vmatprep.subr.mxu0 0.0
  %443 = vmatpush1.msra.mxu0 0.0
  %444 = vmatprep.subr.mxu0 0.0
  %445 = vmatpush1.msra.mxu0 0.0
  %446 = vmatprep.subr.mxu0 0.0
  %447 = vmatpush1.msra.mxu0 0.0
  %448 = vmatprep.subr.mxu0 0.0
  %449 = vmatpush1.msra.mxu0 0.0
  %450 = vmatprep.subr.mxu0 0.0
  %451 = vmatpush1.msra.mxu0 0.0
  %452 = vmatprep.subr.mxu0 0.0
  %453 = vmatpush1.msra.mxu0 0.0
  %454 = vmatprep.subr.mxu0 0.0
  %455 = vmatpush1.msra.mxu0 0.0
  %456 = vmatprep.subr.mxu0 0.0
  %457 = vmatpush1.msra.mxu0 0.0
  %458 = vmatprep.subr.mxu0 0.0
  %459 = vmatpush1.msra.mxu0 0.0
  %460 = vmatprep.subr.mxu0 0.0
  %461 = vmatpush1.msra.mxu0 0.0
  %462 = vmatprep.subr.mxu0 0.0
  %463 = vmatpush1.msra.mxu0 0.0
  %464 = vmatprep.subr.mxu0 0.0
  %465 = vmatpush1.msra.mxu0 0.0
  %466 = vmatprep.mubr.f32.mxu0 0.0
  %467 = vmatmul.mubr.f32.gmra.mrb[0].mxu0 %v340
  %v468 = vpop.f32.mrb[0].mxu0
  %v469 = vadd.f32 0.0, %v468
  %v470 = vpop.f32.mrb[0].mxu0
  %471 = vmatprep.mubr.f32.mxu0 0.0
  %472 = vmatmul.mubr.f32.gmra.mrb[0].mxu0 %v341
  %v473 = vpop.f32.mrb[0].mxu0
  %v474 = vadd.f32 0.0, %v473
  %v475 = vpop.f32.mrb[0].mxu0
  %476 = vmatprep.mubr.f32.mxu0 0.0
  %477 = vmatmul.mubr.f32.gmra.mrb[0].mxu0 %v342
  %v478 = vpop.f32.mrb[0].mxu0
  %v479 = vadd.f32 0.0, %v478
  %v480 = vpop.f32.mrb[0].mxu0
  %481 = vmatprep.mubr.f32.mxu0 0.0
  %482 = vmatmul.mubr.f32.gmra.mrb[0].mxu0 %v343
  %v483 = vpop.f32.mrb[0].mxu0
  %v484 = vadd.f32 0.0, %v483
  %v485 = vpop.f32.mrb[0].mxu0
  %486 = vmatprep.mubr.f32.mxu0 0.0
  %487 = vmatmul.mubr.f32.gmra.mrb[0].mxu0 %v344
  %v488 = vpop.f32.mrb[0].mxu0
  %v489 = vadd.f32 0.0, %v488
  %v490 = vpop.f32.mrb[0].mxu0
  %491 = vmatprep.mubr.f32.mxu0 0.0
  %492 = vmatmul.mubr.f32.gmra.mrb[0].mxu0 %v345
  %v493 = vpop.f32.mrb[0].mxu0
  %v494 = vadd.f32 0.0, %v493
  %v495 = vpop.f32.mrb[0].mxu0
  %496 = vmatprep.mubr.f32.mxu0 0.0
  %497 = vmatmul.mubr.f32.gmra.mrb[0].mxu0 %v346
  %v498 = vpop.f32.mrb[0].mxu0
  %v499 = vadd.f32 0.0, %v498
  %v500 = vpop.f32.mrb[0].mxu0
  %501 = vmatprep.mubr.f32.mxu0 0.0
  %502 = vmatmul.mubr.f32.gmra.mrb[0].mxu0 %v347
  %v503 = vpop.f32.mrb[0].mxu0
  %v504 = vadd.f32 0.0, %v503
  %v505 = vpop.f32.mrb[0].mxu0
  %506 = vmatprep.mubr.f32.mxu0 0.0
  %507 = vmatmul.mubr.f32.gmra.mrb[0].mxu0 %v348
  %v508 = vpop.f32.mrb[0].mxu0
  %v509 = vadd.f32 0.0, %v508
  %v510 = vpop.f32.mrb[0].mxu0
  %511 = vmatprep.mubr.f32.mxu0 0.0
  %512 = vmatmul.mubr.f32.gmra.mrb[0].mxu0 %v349
  %v513 = vpop.f32.mrb[0].mxu0
  %v514 = vadd.f32 0.0, %v513
  %v515 = vpop.f32.mrb[0].mxu0
  %516 = vmatprep.mubr.f32.mxu0 0.0
  %517 = vmatmul.mubr.f32.gmra.mrb[0].mxu0 %v350
  %v518 = vpop.f32.mrb[0].mxu0
  %v519 = vadd.f32 0.0, %v518
  %v520 = vpop.f32.mrb[0].mxu0
  %521 = vmatprep.mubr.f32.mxu0 0.0
  %522 = vmatmul.mubr.f32.gmra.mrb[0].mxu0 %v351
  %v523 = vpop.f32.mrb[0].mxu0
  %v524 = vadd.f32 0.0, %v523
  %v525 = vpop.f32.mrb[0].mxu0
  %526 = vmatprep.mubr.f32.mxu0 0.0
  %527 = vmatmul.mubr.f32.gmra.mrb[0].mxu0 %v352
  %v528 = vpop.f32.mrb[0].mxu0
  %v529 = vadd.f32 0.0, %v528
  %v530 = vpop.f32.mrb[0].mxu0
  %531 = vmatprep.mubr.f32.mxu0 0.0
  %532 = vmatmul.mubr.f32.gmra.mrb[0].mxu0 %v353
  %v533 = vpop.f32.mrb[0].mxu0
  %v534 = vadd.f32 0.0, %v533
  %v535 = vpop.f32.mrb[0].mxu0
  %536 = vmatprep.mubr.f32.mxu0 0.0
  %537 = vmatmul.mubr.f32.gmra.mrb[0].mxu0 %v354
  %v538 = vpop.f32.mrb[0].mxu0
  %v539 = vadd.f32 0.0, %v538
  %v540 = vpop.f32.mrb[0].mxu0
  %541 = vmatprep.mubr.f32.mxu0 0.0
  %542 = vmatmul.mubr.f32.gmra.mrb[0].mxu0 %v355
  %v543 = vpop.f32.mrb[0].mxu0
  %v544 = vadd.f32 0.0, %v543
  %v545 = vpop.f32.mrb[0].mxu0
  %546 = vmatprep.mubr.f32.mxu0 0.0
  %547 = vmatmul.mubr.f32.gmra.mrb[0].mxu0 %v356
  %v548 = vpop.f32.mrb[0].mxu0
  %v549 = vadd.f32 0.0, %v548
  %v550 = vpop.f32.mrb[0].mxu0
  %551 = vmatprep.mubr.f32.mxu0 0.0
  %552 = vmatmul.mubr.f32.gmra.mrb[0].mxu0 %v357
  %v553 = vpop.f32.mrb[0].mxu0
  %v554 = vadd.f32 0.0, %v553
  %v555 = vpop.f32.mrb[0].mxu0
  %556 = vmatprep.mubr.f32.mxu0 0.0
  %557 = vmatmul.mubr.f32.gmra.mrb[0].mxu0 %v358
  %v558 = vpop.f32.mrb[0].mxu0
  %v559 = vadd.f32 0.0, %v558
  %v560 = vpop.f32.mrb[0].mxu0
  %561 = vdwg.mxu0
  %vm562 = vcmask 523264
  %v564 = vsel %vm562, %v359, 0
  %v567 = vsel %vm562, %v360, 0
  %v570 = vsel %vm562, %v361, 0
  %v573 = vsel %vm562, %v362, 0
  %v576 = vsel %vm562, %v363, 0
  %v579 = vsel %vm562, %v364, 0
  %v582 = vsel %vm562, %v365, 0
  %v585 = vsel %vm562, %v366, 0
  %v588 = vsel %vm562, %v367, 0
  %v591 = vsel %vm562, %v368, 0
  %v594 = vsel %vm562, %v369, 0
  %v597 = vsel %vm562, %v370, 0
  %v600 = vsel %vm562, %v371, 0
  %v603 = vsel %vm562, %v372, 0
  %v606 = vsel %vm562, %v373, 0
  %v609 = vsel %vm562, %v374, 0
  %v612 = vsel %vm562, %v375, 0
  %v615 = vsel %vm562, %v376, 0
  %v618 = vsel %vm562, %v377, 0
  %620 = vmatprep.subr.mxu0 0.0
  %621 = vmatpush1.msra.mxu0 %v378
  %622 = vmatprep.subr.mxu0 0.0
  %623 = vmatpush1.msra.mxu0 %v379
  %624 = vmatprep.subr.mxu0 0.0
  %625 = vmatpush1.msra.mxu0 %v380
  %626 = vmatprep.subr.mxu0 0.0
  %627 = vmatpush1.msra.mxu0 %v381
  %628 = vmatprep.subr.mxu0 0.0
  %629 = vmatpush1.msra.mxu0 %v382
  %630 = vmatprep.subr.mxu0 0.0
  %631 = vmatpush1.msra.mxu0 %v383
  %632 = vmatprep.subr.mxu0 0.0
  %633 = vmatpush1.msra.mxu0 %v384
  %634 = vmatprep.subr.mxu0 0.0
  %635 = vmatpush1.msra.mxu0 %v385
  %636 = vmatprep.subr.mxu0 0.0
  %637 = vmatpush1.msra.mxu0 0.0
  %638 = vmatprep.subr.mxu0 0.0
  %639 = vmatpush1.msra.mxu0 0.0
  %640 = vmatprep.subr.mxu0 0.0
  %641 = vmatpush1.msra.mxu0 0.0
  %642 = vmatprep.subr.mxu0 0.0
  %643 = vmatpush1.msra.mxu0 0.0
  %644 = vmatprep.subr.mxu0 0.0
  %645 = vmatpush1.msra.mxu0 0.0
  %646 = vmatprep.subr.mxu0 0.0
  %647 = vmatpush1.msra.mxu0 0.0
  %648 = vmatprep.subr.mxu0 0.0
  %649 = vmatpush1.msra.mxu0 0.0
  %650 = vmatprep.subr.mxu0 0.0
  %651 = vmatpush1.msra.mxu0 0.0
  %652 = vmatprep.subr.mxu0 0.0
  %653 = vmatpush1.msra.mxu0 0.0
  %654 = vmatprep.subr.mxu0 0.0
  %655 = vmatpush1.msra.mxu0 0.0
  %656 = vmatprep.subr.mxu0 0.0
  %657 = vmatpush1.msra.mxu0 0.0
  %658 = vmatprep.subr.mxu0 0.0
  %659 = vmatpush1.msra.mxu0 0.0
  %660 = vmatprep.subr.mxu0 0.0
  %661 = vmatpush1.msra.mxu0 0.0
  %662 = vmatprep.subr.mxu0 0.0
  %663 = vmatpush1.msra.mxu0 0.0
  %664 = vmatprep.subr.mxu0 0.0
  %665 = vmatpush1.msra.mxu0 0.0
  %666 = vmatprep.subr.mxu0 0.0
  %667 = vmatpush1.msra.mxu0 0.0
  %668 = vmatprep.subr.mxu0 0.0
  %669 = vmatpush1.msra.mxu0 0.0
  %670 = vmatprep.subr.mxu0 0.0
  %671 = vmatpush1.msra.mxu0 0.0
  %672 = vmatprep.subr.mxu0 0.0
  %673 = vmatpush1.msra.mxu0 0.0
  %674 = vmatprep.subr.mxu0 0.0
  %675 = vmatpush1.msra.mxu0 0.0
  %676 = vmatprep.subr.mxu0 0.0
  %677 = vmatpush1.msra.mxu0 0.0
  %678 = vmatprep.subr.mxu0 0.0
  %679 = vmatpush1.msra.mxu0 0.0
  %680 = vmatprep.subr.mxu0 0.0
  %681 = vmatpush1.msra.mxu0 0.0
  %682 = vmatprep.subr.mxu0 0.0
  %683 = vmatpush1.msra.mxu0 0.0
  %684 = vmatprep.mubr.f32.mxu0 0.0
  %685 = vmatmul.mubr.f32.gmra.mrb[0].mxu0 %v564
  %v686 = vpop.f32.mrb[0].mxu0
  %v687 = vadd.f32 %v469, %v686
  %v688 = vpop.f32.mrb[0].mxu0
  %689 = vmatprep.mubr.f32.mxu0 0.0
  %690 = vmatmul.mubr.f32.gmra.mrb[0].mxu0 %v567
  %v691 = vpop.f32.mrb[0].mxu0
  %v692 = vadd.f32 %v474, %v691
  %v693 = vpop.f32.mrb[0].mxu0
  %694 = vmatprep.mubr.f32.mxu0 0.0
  %695 = vmatmul.mubr.f32.gmra.mrb[0].mxu0 %v570
  %v696 = vpop.f32.mrb[0].mxu0
  %v697 = vadd.f32 %v479, %v696
  %v698 = vpop.f32.mrb[0].mxu0
  %699 = vmatprep.mubr.f32.mxu0 0.0
  %700 = vmatmul.mubr.f32.gmra.mrb[0].mxu0 %v573
  %v701 = vpop.f32.mrb[0].mxu0
  %v702 = vadd.f32 %v484, %v701
  %v703 = vpop.f32.mrb[0].mxu0
  %704 = vmatprep.mubr.f32.mxu0 0.0
  %705 = vmatmul.mubr.f32.gmra.mrb[0].mxu0 %v576
  %v706 = vpop.f32.mrb[0].mxu0
  %v707 = vadd.f32 %v489, %v706
  %v708 = vpop.f32.mrb[0].mxu0
  %709 = vmatprep.mubr.f32.mxu0 0.0
  %710 = vmatmul.mubr.f32.gmra.mrb[0].mxu0 %v579
  %v711 = vpop.f32.mrb[0].mxu0
  %v712 = vadd.f32 %v494, %v711
  %v713 = vpop.f32.mrb[0].mxu0
  %714 = vmatprep.mubr.f32.mxu0 0.0
  %715 = vmatmul.mubr.f32.gmra.mrb[0].mxu0 %v582
  %v716 = vpop.f32.mrb[0].mxu0
  %v717 = vadd.f32 %v499, %v716
  %v718 = vpop.f32.mrb[0].mxu0
  %719 = vmatprep.mubr.f32.mxu0 0.0
  %720 = vmatmul.mubr.f32.gmra.mrb[0].mxu0 %v585
  %v721 = vpop.f32.mrb[0].mxu0
  %v722 = vadd.f32 %v504, %v721
  %v723 = vpop.f32.mrb[0].mxu0
  %724 = vmatprep.mubr.f32.mxu0 0.0
  %725 = vmatmul.mubr.f32.gmra.mrb[0].mxu0 %v588
  %v726 = vpop.f32.mrb[0].mxu0
  %v727 = vadd.f32 %v509, %v726
  %v728 = vpop.f32.mrb[0].mxu0
  %729 = vmatprep.mubr.f32.mxu0 0.0
  %730 = vmatmul.mubr.f32.gmra.mrb[0].mxu0 %v591
  %v731 = vpop.f32.mrb[0].mxu0
  %v732 = vadd.f32 %v514, %v731
  %v733 = vpop.f32.mrb[0].mxu0
  %734 = vmatprep.mubr.f32.mxu0 0.0
  %735 = vmatmul.mubr.f32.gmra.mrb[0].mxu0 %v594
  %v736 = vpop.f32.mrb[0].mxu0
  %v737 = vadd.f32 %v519, %v736
  %v738 = vpop.f32.mrb[0].mxu0
  %739 = vmatprep.mubr.f32.mxu0 0.0
  %740 = vmatmul.mubr.f32.gmra.mrb[0].mxu0 %v597
  %v741 = vpop.f32.mrb[0].mxu0
  %v742 = vadd.f32 %v524, %v741
  %v743 = vpop.f32.mrb[0].mxu0
  %744 = vmatprep.mubr.f32.mxu0 0.0
  %745 = vmatmul.mubr.f32.gmra.mrb[0].mxu0 %v600
  %v746 = vpop.f32.mrb[0].mxu0
  %v747 = vadd.f32 %v529, %v746
  %v748 = vpop.f32.mrb[0].mxu0
  %749 = vmatprep.mubr.f32.mxu0 0.0
  %750 = vmatmul.mubr.f32.gmra.mrb[0].mxu0 %v603
  %v751 = vpop.f32.mrb[0].mxu0
  %v752 = vadd.f32 %v534, %v751
  %v753 = vpop.f32.mrb[0].mxu0
  %754 = vmatprep.mubr.f32.mxu0 0.0
  %755 = vmatmul.mubr.f32.gmra.mrb[0].mxu0 %v606
  %v756 = vpop.f32.mrb[0].mxu0
  %v757 = vadd.f32 %v539, %v756
  %v758 = vpop.f32.mrb[0].mxu0
  %759 = vmatprep.mubr.f32.mxu0 0.0
  %760 = vmatmul.mubr.f32.gmra.mrb[0].mxu0 %v609
  %v761 = vpop.f32.mrb[0].mxu0
  %v762 = vadd.f32 %v544, %v761
  %v763 = vpop.f32.mrb[0].mxu0
  %764 = vmatprep.mubr.f32.mxu0 0.0
  %765 = vmatmul.mubr.f32.gmra.mrb[0].mxu0 %v612
  %v766 = vpop.f32.mrb[0].mxu0
  %v767 = vadd.f32 %v549, %v766
  %v768 = vpop.f32.mrb[0].mxu0
  %769 = vmatprep.mubr.f32.mxu0 0.0
  %770 = vmatmul.mubr.f32.gmra.mrb[0].mxu0 %v615
  %v771 = vpop.f32.mrb[0].mxu0
  %v772 = vadd.f32 %v554, %v771
  %v773 = vpop.f32.mrb[0].mxu0
  %774 = vmatprep.mubr.f32.mxu0 0.0
  %775 = vmatmul.mubr.f32.gmra.mrb[0].mxu0 %v618
  %v776 = vpop.f32.mrb[0].mxu0
  %v777 = vadd.f32 %v559, %v776
  %v778 = vpop.f32.mrb[0].mxu0
  %779 = vdwg.mxu0
  %v780 = vld [vmem:[%s5] sm:$0x1]
  %v782 = vlaneseq
  %v783 = vshrl.u32 %v782, 7
  %v784 = vsub.s32 0, %v783
  %v785 = vrot.slane %v780, %v784
  %v787 = vadd.f32 %v687, %v785
  %v788 = vadd.f32 %v692, %v785
  %v789 = vadd.f32 %v697, %v785
  %v790 = vadd.f32 %v702, %v785
  %v791 = vadd.f32 %v707, %v785
  %v792 = vadd.f32 %v712, %v785
  %v793 = vadd.f32 %v717, %v785
  %v794 = vadd.f32 %v722, %v785
  %v795 = vadd.f32 %v727, %v785
  %v796 = vadd.f32 %v732, %v785
  %v797 = vadd.f32 %v737, %v785
  %v798 = vadd.f32 %v742, %v785
  %v799 = vadd.f32 %v747, %v785
  %v800 = vadd.f32 %v752, %v785
  %v801 = vadd.f32 %v757, %v785
  %v802 = vadd.f32 %v762, %v785
  %v803 = vadd.f32 %v767, %v785
  %v804 = vadd.f32 %v772, %v785
  %v805 = vadd.f32 %v777, %v785
  %v806 = vxor.u32 %v787, 2147483648
  %v807 = vxor.u32 %v788, 2147483648
  %v808 = vxor.u32 %v789, 2147483648
  %v809 = vxor.u32 %v790, 2147483648
  %v810 = vxor.u32 %v791, 2147483648
  %v811 = vxor.u32 %v792, 2147483648
  %v812 = vxor.u32 %v793, 2147483648
  %v813 = vxor.u32 %v794, 2147483648
  %v814 = vxor.u32 %v795, 2147483648
  %v815 = vxor.u32 %v796, 2147483648
  %v816 = vxor.u32 %v797, 2147483648
  %v817 = vxor.u32 %v798, 2147483648
  %v818 = vxor.u32 %v799, 2147483648
  %v819 = vxor.u32 %v800, 2147483648
  %v820 = vxor.u32 %v801, 2147483648
  %v821 = vxor.u32 %v802, 2147483648
  %v822 = vxor.u32 %v803, 2147483648
  %v823 = vxor.u32 %v804, 2147483648
  %v824 = vxor.u32 %v805, 2147483648
  %v825 = vmul.f32 %v806, 1.442695
  %v826 = vpow.pop %v825
  %v827 = vmul.f32 %v807, 1.442695
  %v828 = vpow.pop %v827
  %v829 = vmul.f32 %v808, 1.442695
  %v830 = vpow.pop %v829
  %v831 = vmul.f32 %v809, 1.442695
  %v832 = vpow.pop %v831
  %v833 = vmul.f32 %v810, 1.442695
  %v834 = vpow.pop %v833
  %v835 = vmul.f32 %v811, 1.442695
  %v836 = vpow.pop %v835
  %v837 = vmul.f32 %v812, 1.442695
  %v838 = vpow.pop %v837
  %v839 = vmul.f32 %v813, 1.442695
  %v840 = vpow.pop %v839
  %v841 = vmul.f32 %v814, 1.442695
  %v842 = vpow.pop %v841
  %v843 = vmul.f32 %v815, 1.442695
  %v844 = vpow.pop %v843
  %v845 = vmul.f32 %v816, 1.442695
  %v846 = vpow.pop %v845
  %v847 = vmul.f32 %v817, 1.442695
  %v848 = vpow.pop %v847
  %v849 = vmul.f32 %v818, 1.442695
  %v850 = vpow.pop %v849
  %v851 = vmul.f32 %v819, 1.442695
  %v852 = vpow.pop %v851
  %v853 = vmul.f32 %v820, 1.442695
  %v854 = vpow.pop %v853
  %v855 = vmul.f32 %v821, 1.442695
  %v856 = vpow.pop %v855
  %v857 = vmul.f32 %v822, 1.442695
  %v858 = vpow.pop %v857
  %v859 = vmul.f32 %v823, 1.442695
  %v860 = vpow.pop %v859
  %v861 = vmul.f32 %v824, 1.442695
  %v862 = vpow.pop %v861
  %v863 = vadd.f32 %v826, 1.0
  %v864 = vadd.f32 %v828, 1.0
  %v865 = vadd.f32 %v830, 1.0
  %v866 = vadd.f32 %v832, 1.0
  %v867 = vadd.f32 %v834, 1.0
  %v868 = vadd.f32 %v836, 1.0
  %v869 = vadd.f32 %v838, 1.0
  %v870 = vadd.f32 %v840, 1.0
  %v871 = vadd.f32 %v842, 1.0
  %v872 = vadd.f32 %v844, 1.0
  %v873 = vadd.f32 %v846, 1.0
  %v874 = vadd.f32 %v848, 1.0
  %v875 = vadd.f32 %v850, 1.0
  %v876 = vadd.f32 %v852, 1.0
  %v877 = vadd.f32 %v854, 1.0
  %v878 = vadd.f32 %v856, 1.0
  %v879 = vadd.f32 %v858, 1.0
  %v880 = vadd.f32 %v860, 1.0
  %v881 = vadd.f32 %v862, 1.0
  %v882 = vrcp.pop %v863
  %v883 = vmul.f32 1.0, %v882
  %v884 = vrcp.pop %v864
  %v885 = vmul.f32 1.0, %v884
  %v886 = vrcp.pop %v865
  %v887 = vmul.f32 1.0, %v886
  %v888 = vrcp.pop %v866
  %v889 = vmul.f32 1.0, %v888
  %v890 = vrcp.pop %v867
  %v891 = vmul.f32 1.0, %v890
  %v892 = vrcp.pop %v868
  %v893 = vmul.f32 1.0, %v892
  %v894 = vrcp.pop %v869
  %v895 = vmul.f32 1.0, %v894
  %v896 = vrcp.pop %v870
  %v897 = vmul.f32 1.0, %v896
  %v898 = vrcp.pop %v871
  %v899 = vmul.f32 1.0, %v898
  %v900 = vrcp.pop %v872
  %v901 = vmul.f32 1.0, %v900
  %v902 = vrcp.pop %v873
  %v903 = vmul.f32 1.0, %v902
  %v904 = vrcp.pop %v874
  %v905 = vmul.f32 1.0, %v904
  %v906 = vrcp.pop %v875
  %v907 = vmul.f32 1.0, %v906
  %v908 = vrcp.pop %v876
  %v909 = vmul.f32 1.0, %v908
  %v910 = vrcp.pop %v877
  %v911 = vmul.f32 1.0, %v910
  %v912 = vrcp.pop %v878
  %v913 = vmul.f32 1.0, %v912
  %v914 = vrcp.pop %v879
  %v915 = vmul.f32 1.0, %v914
  %v916 = vrcp.pop %v880
  %v917 = vmul.f32 1.0, %v916
  %v918 = vrcp.pop %v881
  %v919 = vmul.f32 1.0, %v918
  %v920 = vmul.f32 %v787, %v883
  %v921 = vmul.f32 %v788, %v885
  %v922 = vmul.f32 %v789, %v887
  %v923 = vmul.f32 %v790, %v889
  %v924 = vmul.f32 %v791, %v891
  %v925 = vmul.f32 %v792, %v893
  %v926 = vmul.f32 %v793, %v895
  %v927 = vmul.f32 %v794, %v897
  %v928 = vmul.f32 %v795, %v899
  %v929 = vmul.f32 %v796, %v901
  %v930 = vmul.f32 %v797, %v903
  %v931 = vmul.f32 %v798, %v905
  %v932 = vmul.f32 %v799, %v907
  %v933 = vmul.f32 %v800, %v909
  %v934 = vmul.f32 %v801, %v911
  %v935 = vmul.f32 %v802, %v913
  %v936 = vmul.f32 %v803, %v915
  %v937 = vmul.f32 %v804, %v917
  %v938 = vmul.f32 %v805, %v919
  %939 = vst [vmem:[%s6] sm:$0xff] %v920
  %940 = vst [vmem:[%s6 + $0x8] sm:$0xff] %v921
  %941 = vst [vmem:[%s6 + $0x10] sm:$0xff] %v922
  %942 = vst [vmem:[%s6 + $0x18] sm:$0xff] %v923
  %943 = vst [vmem:[%s6 + $0x20] sm:$0xff] %v924
  %944 = vst [vmem:[%s6 + $0x28] sm:$0xff] %v925
  %945 = vst [vmem:[%s6 + $0x30] sm:$0xff] %v926
  %946 = vst [vmem:[%s6 + $0x38] sm:$0xff] %v927
  %947 = vst [vmem:[%s6 + $0x40] sm:$0xff] %v928
  %948 = vst [vmem:[%s6 + $0x48] sm:$0xff] %v929
  %949 = vst [vmem:[%s6 + $0x50] sm:$0xff] %v930
  %950 = vst [vmem:[%s6 + $0x58] sm:$0xff] %v931
  %951 = vst [vmem:[%s6 + $0x60] sm:$0xff] %v932
  %952 = vst [vmem:[%s6 + $0x68] sm:$0xff] %v933
  %953 = vst [vmem:[%s6 + $0x70] sm:$0xff] %v934
  %954 = vst [vmem:[%s6 + $0x78] sm:$0xff] %v935
  %955 = vst [vmem:[%s6 + $0x80] sm:$0xff] %v936
  %956 = vst [vmem:[%s6 + $0x88] sm:$0xff] %v937
  %957 = vst [vmem:[%s6 + $0x90] sm:$0xff] %v938
  // Predicated region
  $region26: #{atom_to_edge_pallas.1} parent=0 // pred_check
    _
  $region27: #{atom_to_edge_pallas.1} parent=0 // pred_check_branch
    %959 = sbr.rel (0) target = $region29
  $region28: #{atom_to_edge_pallas.1} parent=0 // pred_region
    _
  $region29: #{atom_to_edge_pallas.1} parent=0 // pred_fallthru
    _
  // Predicated region
  $region30: #{atom_to_edge_pallas.1} parent=0 // pred_check
    _
  $region31: #{atom_to_edge_pallas.1} parent=0 // pred_check_branch
    %961 = sbr.rel (0) target = $region33
  $region32: #{atom_to_edge_pallas.1} parent=0 // pred_region
    _
  $region33: #{atom_to_edge_pallas.1} parent=0 // pred_fallthru
    _

</llo_original>
